<compile_context>
chip_gen: v6e
topology: v6e:2x2x1
jax: 0.10.0
libtpu: 0.0.40
codegen_flags: <defaults>
</compile_context>

<pallas_src>
import functools
import math

import jax
import jax.numpy as jnp
import numpy as np
from jax.experimental import pallas as pl
from jax.experimental.pallas import tpu as pltpu

_MIB = 1024 * 1024


def _layernorm(v, gamma, beta, eps=1e-5):
    mu = jnp.mean(v, axis=-1, keepdims=True)
    var = jnp.mean((v - mu) ** 2, axis=-1, keepdims=True)  # biased var, like torch LN
    return (v - mu) * jax.lax.rsqrt(var + eps) * gamma + beta


def _pick_tile(dim, target):
    """Largest tile <= target dividing `dim`; prefers 256-multiples, then 128, then 8."""
    if dim <= target:
        return dim
    for quantum in (256, 128, 8):
        t = (min(target, dim) // quantum) * quantum
        while t >= quantum:
            if dim % t == 0:
                return t
            t -= quantum
    return dim


def _pick_lane_tile(dim, target):
    """Lane-dim (last-axis) tile: must be a 128-multiple dividing `dim`, else full."""
    if dim <= target:
        return dim
    t = (min(target, dim) // 128) * 128
    while t >= 128:
        if dim % t == 0:
            return t
        t -= 128
    return dim


def _halve_ok(t):
    # Keep tiles >= 128 and multiples of 8 after halving (so BlockSpecs stay legal).
    return t > 128 and t % 16 == 0


def _padded_bytes(shape, dtype):
    """VMEM footprint of one buffer incl. (sublane, lane) tile padding (D<128 -> 128)."""
    itemsize = np.dtype(dtype).itemsize
    dims = list(shape)
    if not dims:
        return itemsize
    dims[-1] = -(-dims[-1] // 128) * 128
    if len(dims) >= 2:
        sub = max(8, (8 * 4) // itemsize)          # 8 rows f32, 16 bf16 per vreg
        dims[-2] = -(-dims[-2] // sub) * sub
    n = 1
    for d in dims:
        n *= d
    return n * itemsize


def _vmem_budget():
    """Per-generation scoped-VMEM budget (~100 MiB v5e/v6e, ~48 MiB v7x)."""
    cap = 64 * _MIB
    try:
        info = pltpu.get_tpu_info()
        c = int(getattr(info, "vmem_capacity_bytes", 0) or 0)
        if c > 0:
            cap = c
    except Exception:
        pass
    return max(32 * _MIB, min(cap - 16 * _MIB, int(0.8 * cap)))


def _vmem_limit(est_bytes, budget):
    return int(min(budget, max(32 * _MIB, 2 * est_bytes)))


# --------------------------------------------------------------------------- #
# Kernel 1: LayerNorm1 + fused QKV projection -> head-major (B, H, S, D).      #
# --------------------------------------------------------------------------- #
def _ln_qkv_kernel(x_ref, ln1g_ref, ln1b_ref, wqkv_ref, bqkv_ref,
                   q_ref, k_ref, v_ref,
                   *, num_heads, head_dim, embed, matmul_dtype):
    x = x_ref[...].astype(jnp.float32)                          # (TS, E)
    xn = _layernorm(x, ln1g_ref[0], ln1b_ref[0])                # f32 elementwise
    # Single fused (TS, E) x (E, 3E) matmul: one MXU weight-push/drain phase,
    # f32 accumulation. Q columns are pre-scaled by 1/sqrt(D) in the wrapper.
    y = jnp.dot(xn.astype(matmul_dtype), wqkv_ref[...],
                preferred_element_type=jnp.float32) + bqkv_ref[0]
    y = y.astype(q_ref.dtype)                                   # (TS, 3E)
    for idx, out_ref in enumerate((q_ref, k_ref, v_ref)):
        slab = y[:, idx * embed:(idx + 1) * embed]              # (TS, E) static slice
        heads = [slab[:, h * head_dim:(h + 1) * head_dim] for h in range(num_heads)]
        # One dense (H, TS, D) store per output instead of H masked per-head stores.
        out_ref[...] = jnp.stack(heads, axis=0)


# --------------------------------------------------------------------------- #
# Kernel 2: weight-free flash attention (online softmax over KV tiles).        #
# Output: concatenated heads, lane-dense (B, S, E).                            #
# --------------------------------------------------------------------------- #
def _flash_attn_kernel(q_ref, k_ref, v_ref, o_ref,
                       m_sc, l_sc, acc_sc,
                       *, matmul_dtype, approx_recip):
    ki = pl.program_id(2)

    @pl.when(ki == 0)
    def _init():
        m_sc[...] = jnp.full(m_sc.shape, -jnp.inf, dtype=m_sc.dtype)
        l_sc[...] = jnp.zeros(l_sc.shape, dtype=l_sc.dtype)
        acc_sc[...] = jnp.zeros(acc_sc.shape, dtype=acc_sc.dtype)

    q = q_ref[...]                                              # (H, TQ, D), pre-scaled
    k = k_ref[...]                                              # (H, TK, D)
    v = v_ref[...]                                              # (H, TK, D)

    # Batched-head scores; contraction on the last dim -> no explicit transpose.
    s = jnp.einsum('hqd,hkd->hqk', q, k, preferred_element_type=jnp.float32)
    # TODO(synk): attention_mask support would add an additive (TQ, TK) mask tile here.

    m_prev = m_sc[...]
    m_new = jnp.maximum(m_prev, s.max(axis=-1, keepdims=True))
    alpha = jnp.exp(m_prev - m_new)
    # TODO(synk): if the EUP binds (D<=64), compute exp in bf16 on v6e/v7x.
    p = jnp.exp(s - m_new)
    l_sc[...] = alpha * l_sc[...] + p.sum(axis=-1, keepdims=True)
    acc_sc[...] = alpha * acc_sc[...] + jnp.einsum(
        'hqk,hkd->hqd', p.astype(matmul_dtype), v, preferred_element_type=jnp.float32)
    m_sc[...] = m_new

    @pl.when(ki == pl.num_programs(2) - 1)
    def _finalize():
        inv_l = pl.reciprocal(l_sc[...], approx=approx_recip)
        attn = (acc_sc[...] * inv_l).astype(o_ref.dtype)        # (H, TQ, D)
        num_heads = attn.shape[0]
        # Concatenate heads along lanes -> one lane-dense (TQ, E) store.
        o_ref[...] = jnp.concatenate([attn[h] for h in range(num_heads)], axis=-1)


# --------------------------------------------------------------------------- #
# Kernel 3: out-projection + residual1 + LN2 + FFN (streamed over 4E) + res2.  #
# --------------------------------------------------------------------------- #
def _out_ffn_kernel(x_ref, attn_ref, wo_ref, bo_ref, ln2g_ref, ln2b_ref,
                    w1_ref, b1_ref, w2_ref, b2_ref,
                    o_ref,
                    x1_sc, xn2_sc, acc_sc,
                    *, matmul_dtype):
    fi = pl.program_id(2)

    @pl.when(fi == 0)
    def _prologue():
        # Output projection as a single (TQ, E) x (E, E) matmul (K = E fills the MXU),
        # then residual 1 and LayerNorm 2.
        attn_out = jnp.dot(attn_ref[...], wo_ref[...],
                           preferred_element_type=jnp.float32) + bo_ref[0]
        x1 = x_ref[...].astype(jnp.float32) + attn_out
        x1_sc[...] = x1
        xn2_sc[...] = _layernorm(x1, ln2g_ref[0], ln2b_ref[0]).astype(xn2_sc.dtype)
        acc_sc[...] = jnp.zeros(acc_sc.shape, dtype=acc_sc.dtype)

    # FFN streamed over 4E-column chunks of W1 / matching row chunks of W2:
    # live intermediate is only (TQ, TF); W1/W2 are never fully resident in VMEM.
    h = jnp.dot(xn2_sc[...], w1_ref[...],
                preferred_element_type=jnp.float32) + b1_ref[0]
    h = jax.nn.gelu(h, approximate=False)                       # exact, like F.gelu
    acc_sc[...] += jnp.dot(h.astype(matmul_dtype), w2_ref[...],
                           preferred_element_type=jnp.float32)

    @pl.when(fi == pl.num_programs(2) - 1)
    def _epilogue():
        o_ref[...] = (x1_sc[...] + acc_sc[...] + b2_ref[0]).astype(o_ref.dtype)


# --------------------------------------------------------------------------- #
# Wrapper                                                                      #
# --------------------------------------------------------------------------- #
def transformer_block(x, params, *, num_heads, attention_mask=None,
                      matmul_dtype=None, s_tile=512, q_tile=512, kv_tile=512,
                      ff_tile=1024):
    # TODO(synk): only the attention_mask=None path is implemented.
    assert attention_mask is None, "attention_mask is not supported by this kernel"
    B, S, E = x.shape
    assert E % num_heads == 0
    D = E // num_heads
    F = 4 * E
    if matmul_dtype is None:
        matmul_dtype = x.dtype
    xdt = x.dtype

    (ln1g, ln1b, wq, bq, wk, bk, wv, bv, wo, bo,
     ln2g, ln2b, w1, b1, w2, b2) = params

    scale = 1.0 / math.sqrt(D)
    # Fold the softmax scale into the Q projection (zero in-kernel cost) and fuse
    # Wq/Wk/Wv into one (E, 3E) weight for a single MXU pass.
    wqkv = jnp.concatenate([wq * scale, wk, wv], axis=1).astype(matmul_dtype)
    bqkv = jnp.concatenate([bq * scale, bk, bv], axis=1).astype(jnp.float32)
    wo_m = wo.astype(matmul_dtype)
    w1_m = w1.astype(matmul_dtype)
    w2_m = w2.astype(matmul_dtype)
    # TODO(synk): fp8 weights on v7x would halve weight bytes / double MXU rate,
    # but need explicit scaling (not drop-in).

    budget = _vmem_budget()
    res = pl.BlockSpec(memory_space=pltpu.MemorySpace.VMEM)  # resident, not double-buffered
    approx_recip = bool(np.dtype(matmul_dtype) == np.dtype(jnp.bfloat16))

    TS = _pick_tile(S, s_tile)
    TQ = _pick_tile(S, q_tile)
    TK = _pick_tile(S, kv_tile)
    TM = _pick_tile(S, q_tile)
    TF = _pick_lane_tile(F, ff_tile)

    # ---- call 1: LN1 + fused QKV projection -> head-major (B, H, S, D) ----
    def est1_fn(ts):
        return (2 * _padded_bytes((ts, E), xdt)
                + 3 * 2 * _padded_bytes((num_heads, ts, D), matmul_dtype)
                + _padded_bytes((E, 3 * E), matmul_dtype)
                + _padded_bytes((1, 3 * E), jnp.float32)
                + 2 * _padded_bytes((1, E), jnp.float32))
    while est1_fn(TS) > budget and _halve_ok(TS):
        TS //= 2

    qkv_shape = jax.ShapeDtypeStruct((B, num_heads, S, D), matmul_dtype)
    q, k, v = pl.pallas_call(
        functools.partial(_ln_qkv_kernel, num_heads=num_heads, head_dim=D,
                          embed=E, matmul_dtype=matmul_dtype),
        out_shape=(qkv_shape, qkv_shape, qkv_shape),
        grid_spec=pltpu.PrefetchScalarGridSpec(
            num_scalar_prefetch=0,
            grid=(B, S // TS),
            in_specs=[pl.BlockSpec((None, TS, E), lambda b, si: (b, si, 0)),
                      res, res, res, res],
            out_specs=[pl.BlockSpec((None, num_heads, TS, D),
                                    lambda b, si: (b, 0, si, 0))] * 3,
        ),
        compiler_params=pltpu.CompilerParams(
            dimension_semantics=("parallel", "parallel"),
            vmem_limit_bytes=_vmem_limit(est1_fn(TS), budget)),
    )(x, ln1g, ln1b, wqkv, bqkv)

    # ---- call 2: weight-free flash attention -> concatenated heads (B, S, E) ----
    def est2_fn(tq, tk):
        return (2 * _padded_bytes((num_heads, tq, D), matmul_dtype)
                + 4 * _padded_bytes((num_heads, tk, D), matmul_dtype)
                + 2 * _padded_bytes((tq, E), matmul_dtype)
                + 2 * _padded_bytes((num_heads, tq, 1), jnp.float32)
                + _padded_bytes((num_heads, tq, D), jnp.float32))
    while est2_fn(TQ, TK) > budget:
        if TK >= TQ and _halve_ok(TK):
            TK //= 2
        elif _halve_ok(TQ):
            TQ //= 2
        else:
            break

    attn = pl.pallas_call(
        functools.partial(_flash_attn_kernel, matmul_dtype=matmul_dtype,
                          approx_recip=approx_recip),
        out_shape=jax.ShapeDtypeStruct((B, S, E), matmul_dtype),
        grid_spec=pltpu.PrefetchScalarGridSpec(
            num_scalar_prefetch=0,
            grid=(B, S // TQ, S // TK),
            in_specs=[
                pl.BlockSpec((None, num_heads, TQ, D),
                             lambda b, qi, ki: (b, 0, qi, 0)),
                # TODO(synk): pipeline_mode=pl.Buffered(3) on k/v if DMA is exposed
                # and VMEM allows (v5e/v6e).
                pl.BlockSpec((None, num_heads, TK, D),
                             lambda b, qi, ki: (b, 0, ki, 0)),
                pl.BlockSpec((None, num_heads, TK, D),
                             lambda b, qi, ki: (b, 0, ki, 0)),
            ],
            out_specs=pl.BlockSpec((None, TQ, E), lambda b, qi, ki: (b, qi, 0)),
            scratch_shapes=[
                pltpu.VMEM((num_heads, TQ, 1), jnp.float32),   # running max
                pltpu.VMEM((num_heads, TQ, 1), jnp.float32),   # running denominator
                pltpu.VMEM((num_heads, TQ, D), jnp.float32),   # running numerator
            ],
        ),
        compiler_params=pltpu.CompilerParams(
            dimension_semantics=("parallel", "parallel", "arbitrary"),
            vmem_limit_bytes=_vmem_limit(est2_fn(TQ, TK), budget)),
    )(q, k, v)

    # ---- call 3: out-proj + residual 1 + LN2 + FFN (streamed over 4E) + residual 2 ----
    def est3_fn(tm, tf):
        return (2 * _padded_bytes((tm, E), xdt)                 # x blocks
                + 2 * _padded_bytes((tm, E), matmul_dtype)      # attn blocks
                + 2 * _padded_bytes((E, tf), matmul_dtype)      # W1 chunks
                + 2 * _padded_bytes((1, tf), jnp.float32)       # b1 chunks
                + 2 * _padded_bytes((tf, E), matmul_dtype)      # W2 chunks
                + 2 * _padded_bytes((tm, E), xdt)               # out blocks
                + _padded_bytes((E, E), matmul_dtype)           # Wo resident
                + 4 * _padded_bytes((1, E), jnp.float32)        # bo, ln2g/b, b2
                + 2 * _padded_bytes((tm, E), jnp.float32)       # x1 + FFN acc scratch
                + _padded_bytes((tm, E), matmul_dtype))         # LN2 scratch
    while est3_fn(TM, TF) > budget and _halve_ok(TM):
        TM //= 2

    out = pl.pallas_call(
        functools.partial(_out_ffn_kernel, matmul_dtype=matmul_dtype),
        out_shape=jax.ShapeDtypeStruct((B, S, E), x.dtype),
        grid_spec=pltpu.PrefetchScalarGridSpec(
            num_scalar_prefetch=0,
            grid=(B, S // TM, F // TF),
            in_specs=[
                pl.BlockSpec((None, TM, E), lambda b, mi, fi: (b, mi, 0)),  # x
                pl.BlockSpec((None, TM, E), lambda b, mi, fi: (b, mi, 0)),  # attn heads
                res, res, res, res,                                         # Wo,bo,ln2g,ln2b
                pl.BlockSpec((E, TF), lambda b, mi, fi: (0, fi)),           # W1 chunk
                pl.BlockSpec((1, TF), lambda b, mi, fi: (0, fi)),           # b1 chunk
                pl.BlockSpec((TF, E), lambda b, mi, fi: (fi, 0)),           # W2 chunk
                res,                                                        # b2
            ],
            out_specs=pl.BlockSpec((None, TM, E), lambda b, mi, fi: (b, mi, 0)),
            scratch_shapes=[
                pltpu.VMEM((TM, E), jnp.float32),     # x1 (residual-1 result)
                pltpu.VMEM((TM, E), matmul_dtype),    # LN2 output (MXU operand)
                pltpu.VMEM((TM, E), jnp.float32),     # FFN accumulator
            ],
        ),
        compiler_params=pltpu.CompilerParams(
            dimension_semantics=("parallel", "parallel", "arbitrary"),
            vmem_limit_bytes=_vmem_limit(est3_fn(TM, TF), budget)),
    )(x, attn, wo_m, bo, ln2g, ln2b, w1_m, b1, w2_m, b2)
    return out


def transformer_block_ref(x, params, *, num_heads):
    """Plain-JAX reference mirroring the PyTorch module (eval mode)."""
    (ln1g, ln1b, wq, bq, wk, bk, wv, bv, wo, bo,
     ln2g, ln2b, w1, b1, w2, b2) = params
    B, S, E = x.shape
    D = E // num_heads

    def ln(v, g, b):
        mu = jnp.mean(v, -1, keepdims=True)
        var = jnp.mean((v - mu) ** 2, -1, keepdims=True)
        return (v - mu) / jnp.sqrt(var + 1e-5) * g[0] + b[0]

    xn = ln(x, ln1g, ln1b)
    q = xn @ wq + bq[0]
    k = xn @ wk + bk[0]
    v = xn @ wv + bv[0]
    q = q.reshape(B, S, num_heads, D).transpose(0, 2, 1, 3)
    k = k.reshape(B, S, num_heads, D).transpose(0, 2, 1, 3)
    v = v.reshape(B, S, num_heads, D).transpose(0, 2, 1, 3)
    att = jax.nn.softmax(q @ jnp.swapaxes(k, -2, -1) / math.sqrt(D), axis=-1)
    out = (att @ v).transpose(0, 2, 1, 3).reshape(B, S, E)
    x = x + out @ wo + bo[0]
    xn2 = ln(x, ln2g, ln2b)
    h = jax.nn.gelu(xn2 @ w1 + b1[0], approximate=False)
    x = x + h @ w2 + b2[0]
    return x


if __name__ == "__main__":
    B, S, E, H = 2, 16, 64, 4
    H4 = 4 * E

    key = jax.random.PRNGKey(0)
    ks = jax.random.split(key, 16)

    def w(k, shape, scale=0.02):
        return (scale * jax.random.normal(k, shape)).astype(jnp.float32)

    params = (
        jnp.ones((1, E), jnp.float32),   # ln1 gamma
        jnp.zeros((1, E), jnp.float32),  # ln1 beta
        w(ks[0], (E, E)),  w(ks[1], (1, E)),    # Wq, bq
        w(ks[2], (E, E)),  w(ks[3], (1, E)),    # Wk, bk
        w(ks[4], (E, E)),  w(ks[5], (1, E)),    # Wv, bv
        w(ks[6], (E, E)),  w(ks[7], (1, E)),    # Wo, bo
        jnp.ones((1, E), jnp.float32),   # ln2 gamma
        jnp.zeros((1, E), jnp.float32),  # ln2 beta
        w(ks[8], (E, H4)), w(ks[9], (1, H4)),   # fc1
        w(ks[10], (H4, E)), w(ks[11], (1, E)),  # fc2
    )

    x = jax.random.normal(ks[12], (B, S, E), dtype=jnp.float32)
    ref = transformer_block_ref(x, params, num_heads=H)

    # f32 MXU-operand path; small tiles exercise multi-tile online softmax and
    # the streamed-FFN grid axis (4E = 256, ff_tile = 128 -> 2 chunks).
    out_f32 = transformer_block(x, params, num_heads=H, matmul_dtype=jnp.float32,
                                s_tile=8, q_tile=8, kv_tile=8, ff_tile=128)
    out_f32 = jax.block_until_ready(out_f32)
    np.testing.assert_allclose(np.asarray(out_f32), np.asarray(ref),
                               rtol=1e-4, atol=1e-4)

    # bf16 MXU-operand path (v6e/v7x-style), f32 accumulation, looser tolerance.
    out_bf16 = transformer_block(x, params, num_heads=H, matmul_dtype=jnp.bfloat16,
                                 s_tile=8, q_tile=8, kv_tile=8, ff_tile=128)
    out_bf16 = jax.block_until_ready(out_bf16)
    np.testing.assert_allclose(np.asarray(out_bf16), np.asarray(ref),
                               rtol=2e-2, atol=2e-2)

    print("KERNEL_OK")
</pallas_src>

<mosaic_0001>
module attributes {stable_mosaic.version = 11 : i64} {
  func.func @_ln_qkv_kernel(%arg0: i32, %arg1: i32, %arg2: memref<1x8x64xf32, #tpu.memory_space<vmem>>, %arg3: memref<1x64xf32, #tpu.memory_space<vmem>>, %arg4: memref<1x64xf32, #tpu.memory_space<vmem>>, %arg5: memref<64x192xf32, #tpu.memory_space<vmem>>, %arg6: memref<1x192xf32, #tpu.memory_space<vmem>>, %arg7: memref<1x4x8x16xf32, #tpu.memory_space<vmem>>, %arg8: memref<1x4x8x16xf32, #tpu.memory_space<vmem>>, %arg9: memref<1x4x8x16xf32, #tpu.memory_space<vmem>>) attributes {dimension_semantics = [#tpu.dimension_semantics<parallel>, #tpu.dimension_semantics<parallel>], iteration_bounds = array<i64: 2, 2>, scalar_prefetch = 0 : i64, scratch_operands = 0 : i64, tpu.core_type = #tpu.core_type<tc>, window_params = [{transform_indices = @transform_0, window_bounds = array<i64: 1, 8, 64>}, {pipeline_mode = #tpu.pipeline_mode<synchronous>, transform_indices = @transform_1, window_bounds = array<i64: 1, 64>}, {pipeline_mode = #tpu.pipeline_mode<synchronous>, transform_indices = @transform_2, window_bounds = array<i64: 1, 64>}, {pipeline_mode = #tpu.pipeline_mode<synchronous>, transform_indices = @transform_3, window_bounds = array<i64: 64, 192>}, {pipeline_mode = #tpu.pipeline_mode<synchronous>, transform_indices = @transform_4, window_bounds = array<i64: 1, 192>}, {transform_indices = @transform_5, window_bounds = array<i64: 1, 4, 8, 16>}, {transform_indices = @transform_6, window_bounds = array<i64: 1, 4, 8, 16>}, {transform_indices = @transform_7, window_bounds = array<i64: 1, 4, 8, 16>}]} {
    %c0 = arith.constant 0 : index
    %c0_0 = arith.constant 0 : index
    %c0_1 = arith.constant 0 : index
    %0 = vector.load %arg2[%c0, %c0_0, %c0_1] : memref<1x8x64xf32, #tpu.memory_space<vmem>>, vector<1x8x64xf32>
    %1 = vector.shape_cast %0 : vector<1x8x64xf32> to vector<8x64xf32>
    %c0_2 = arith.constant 0 : index
    %c0_3 = arith.constant 0 : index
    %2 = vector.load %arg3[%c0_2, %c0_3] : memref<1x64xf32, #tpu.memory_space<vmem>>, vector<1x64xf32>
    %3 = vector.shape_cast %2 : vector<1x64xf32> to vector<64xf32>
    %c0_4 = arith.constant 0 : index
    %c0_5 = arith.constant 0 : index
    %4 = vector.load %arg4[%c0_4, %c0_5] : memref<1x64xf32, #tpu.memory_space<vmem>>, vector<1x64xf32>
    %5 = vector.shape_cast %4 : vector<1x64xf32> to vector<64xf32>
    %cst = arith.constant dense<0.000000e+00> : vector<8xf32>
    %6 = vector.multi_reduction <add>, %1, %cst [1] : vector<8x64xf32> to vector<8xf32>
    %7 = vector.shape_cast %6 : vector<8xf32> to vector<8x1xf32>
    %cst_6 = arith.constant 6.400000e+01 : f32
    %8 = vector.broadcast %cst_6 : f32 to vector<8x1xf32>
    %9 = arith.divf %7, %8 : vector<8x1xf32>
    %10 = vector.broadcast %9 : vector<8x1xf32> to vector<8x64xf32>
    %11 = arith.subf %1, %10 : vector<8x64xf32>
    %12 = arith.mulf %11, %11 : vector<8x64xf32>
    %cst_7 = arith.constant dense<0.000000e+00> : vector<8xf32>
    %13 = vector.multi_reduction <add>, %12, %cst_7 [1] : vector<8x64xf32> to vector<8xf32>
    %14 = vector.shape_cast %13 : vector<8xf32> to vector<8x1xf32>
    %cst_8 = arith.constant 6.400000e+01 : f32
    %15 = vector.broadcast %cst_8 : f32 to vector<8x1xf32>
    %16 = arith.divf %14, %15 : vector<8x1xf32>
    %17 = vector.broadcast %9 : vector<8x1xf32> to vector<8x64xf32>
    %18 = arith.subf %1, %17 : vector<8x64xf32>
    %cst_9 = arith.constant 9.99999974E-6 : f32
    %19 = vector.broadcast %cst_9 : f32 to vector<8x1xf32>
    %20 = arith.addf %16, %19 : vector<8x1xf32>
    %21 = math.rsqrt %20 : vector<8x1xf32>
    %22 = vector.broadcast %21 : vector<8x1xf32> to vector<8x64xf32>
    %23 = arith.mulf %18, %22 : vector<8x64xf32>
    %24 = vector.shape_cast %3 : vector<64xf32> to vector<1x64xf32>
    %25 = vector.broadcast %24 : vector<1x64xf32> to vector<8x64xf32>
    %26 = arith.mulf %23, %25 : vector<8x64xf32>
    %27 = vector.shape_cast %5 : vector<64xf32> to vector<1x64xf32>
    %28 = vector.broadcast %27 : vector<1x64xf32> to vector<8x64xf32>
    %29 = arith.addf %26, %28 : vector<8x64xf32>
    %c0_10 = arith.constant 0 : index
    %c0_11 = arith.constant 0 : index
    %30 = vector.load %arg5[%c0_10, %c0_11] : memref<64x192xf32, #tpu.memory_space<vmem>>, vector<64x192xf32>
    %cst_12 = arith.constant dense<0.000000e+00> : vector<8x192xf32>
    %31 = tpu.matmul %29, %30, %cst_12 {dimension_numbers = #tpu.dot_dimension_numbers<[1], [0], [0], [1], [0, 0, 1, 1], [], []>} : vector<8x64xf32>, vector<64x192xf32>, vector<8x192xf32> -> vector<8x192xf32>
    %c0_13 = arith.constant 0 : index
    %c0_14 = arith.constant 0 : index
    %32 = vector.load %arg6[%c0_13, %c0_14] : memref<1x192xf32, #tpu.memory_space<vmem>>, vector<1x192xf32>
    %33 = vector.shape_cast %32 : vector<1x192xf32> to vector<192xf32>
    %34 = vector.shape_cast %33 : vector<192xf32> to vector<1x192xf32>
    %35 = vector.broadcast %34 : vector<1x192xf32> to vector<8x192xf32>
    %36 = arith.addf %31, %35 : vector<8x192xf32>
    %37 = vector.extract_strided_slice %36 {offsets = [0, 0], sizes = [8, 64], strides = [1, 1]} : vector<8x192xf32> to vector<8x64xf32>
    %38 = vector.extract_strided_slice %37 {offsets = [0, 0], sizes = [8, 16], strides = [1, 1]} : vector<8x64xf32> to vector<8x16xf32>
    %39 = vector.extract_strided_slice %37 {offsets = [0, 16], sizes = [8, 16], strides = [1, 1]} : vector<8x64xf32> to vector<8x16xf32>
    %40 = vector.extract_strided_slice %37 {offsets = [0, 32], sizes = [8, 16], strides = [1, 1]} : vector<8x64xf32> to vector<8x16xf32>
    %41 = vector.extract_strided_slice %37 {offsets = [0, 48], sizes = [8, 16], strides = [1, 1]} : vector<8x64xf32> to vector<8x16xf32>
    %42 = vector.shape_cast %38 : vector<8x16xf32> to vector<1x8x16xf32>
    %43 = vector.shape_cast %39 : vector<8x16xf32> to vector<1x8x16xf32>
    %44 = vector.shape_cast %40 : vector<8x16xf32> to vector<1x8x16xf32>
    %45 = vector.shape_cast %41 : vector<8x16xf32> to vector<1x8x16xf32>
    %46 = tpu.concatenate %42, %43, %44, %45 in 0 : vector<1x8x16xf32>, vector<1x8x16xf32>, vector<1x8x16xf32>, vector<1x8x16xf32> -> vector<4x8x16xf32>
    %c0_15 = arith.constant 0 : index
    %c0_16 = arith.constant 0 : index
    %c0_17 = arith.constant 0 : index
    %c0_18 = arith.constant 0 : index
    %47 = vector.load %arg7[%c0_15, %c0_16, %c0_17, %c0_18] : memref<1x4x8x16xf32, #tpu.memory_space<vmem>>, vector<1x4x8x16xf32>
    %48 = vector.shape_cast %47 : vector<1x4x8x16xf32> to vector<4x8x16xf32>
    %49 = vector.shape_cast %46 : vector<4x8x16xf32> to vector<1x4x8x16xf32>
    tpu.vector_store %arg7[%c0_15, %c0_16, %c0_17, %c0_18], %49 {strides = array<i32>} : memref<1x4x8x16xf32, #tpu.memory_space<vmem>>, vector<1x4x8x16xf32>,
    %50 = vector.extract_strided_slice %36 {offsets = [0, 64], sizes = [8, 64], strides = [1, 1]} : vector<8x192xf32> to vector<8x64xf32>
    %51 = vector.extract_strided_slice %50 {offsets = [0, 0], sizes = [8, 16], strides = [1, 1]} : vector<8x64xf32> to vector<8x16xf32>
    %52 = vector.extract_strided_slice %50 {offsets = [0, 16], sizes = [8, 16], strides = [1, 1]} : vector<8x64xf32> to vector<8x16xf32>
    %53 = vector.extract_strided_slice %50 {offsets = [0, 32], sizes = [8, 16], strides = [1, 1]} : vector<8x64xf32> to vector<8x16xf32>
    %54 = vector.extract_strided_slice %50 {offsets = [0, 48], sizes = [8, 16], strides = [1, 1]} : vector<8x64xf32> to vector<8x16xf32>
    %55 = vector.shape_cast %51 : vector<8x16xf32> to vector<1x8x16xf32>
    %56 = vector.shape_cast %52 : vector<8x16xf32> to vector<1x8x16xf32>
    %57 = vector.shape_cast %53 : vector<8x16xf32> to vector<1x8x16xf32>
    %58 = vector.shape_cast %54 : vector<8x16xf32> to vector<1x8x16xf32>
    %59 = tpu.concatenate %55, %56, %57, %58 in 0 : vector<1x8x16xf32>, vector<1x8x16xf32>, vector<1x8x16xf32>, vector<1x8x16xf32> -> vector<4x8x16xf32>
    %c0_19 = arith.constant 0 : index
    %c0_20 = arith.constant 0 : index
    %c0_21 = arith.constant 0 : index
    %c0_22 = arith.constant 0 : index
    %60 = vector.load %arg8[%c0_19, %c0_20, %c0_21, %c0_22] : memref<1x4x8x16xf32, #tpu.memory_space<vmem>>, vector<1x4x8x16xf32>
    %61 = vector.shape_cast %60 : vector<1x4x8x16xf32> to vector<4x8x16xf32>
    %62 = vector.shape_cast %59 : vector<4x8x16xf32> to vector<1x4x8x16xf32>
    tpu.vector_store %arg8[%c0_19, %c0_20, %c0_21, %c0_22], %62 {strides = array<i32>} : memref<1x4x8x16xf32, #tpu.memory_space<vmem>>, vector<1x4x8x16xf32>,
    %63 = vector.extract_strided_slice %36 {offsets = [0, 128], sizes = [8, 64], strides = [1, 1]} : vector<8x192xf32> to vector<8x64xf32>
    %64 = vector.extract_strided_slice %63 {offsets = [0, 0], sizes = [8, 16], strides = [1, 1]} : vector<8x64xf32> to vector<8x16xf32>
    %65 = vector.extract_strided_slice %63 {offsets = [0, 16], sizes = [8, 16], strides = [1, 1]} : vector<8x64xf32> to vector<8x16xf32>
    %66 = vector.extract_strided_slice %63 {offsets = [0, 32], sizes = [8, 16], strides = [1, 1]} : vector<8x64xf32> to vector<8x16xf32>
    %67 = vector.extract_strided_slice %63 {offsets = [0, 48], sizes = [8, 16], strides = [1, 1]} : vector<8x64xf32> to vector<8x16xf32>
    %68 = vector.shape_cast %64 : vector<8x16xf32> to vector<1x8x16xf32>
    %69 = vector.shape_cast %65 : vector<8x16xf32> to vector<1x8x16xf32>
    %70 = vector.shape_cast %66 : vector<8x16xf32> to vector<1x8x16xf32>
    %71 = vector.shape_cast %67 : vector<8x16xf32> to vector<1x8x16xf32>
    %72 = tpu.concatenate %68, %69, %70, %71 in 0 : vector<1x8x16xf32>, vector<1x8x16xf32>, vector<1x8x16xf32>, vector<1x8x16xf32> -> vector<4x8x16xf32>
    %c0_23 = arith.constant 0 : index
    %c0_24 = arith.constant 0 : index
    %c0_25 = arith.constant 0 : index
    %c0_26 = arith.constant 0 : index
    %73 = vector.load %arg9[%c0_23, %c0_24, %c0_25, %c0_26] : memref<1x4x8x16xf32, #tpu.memory_space<vmem>>, vector<1x4x8x16xf32>
    %74 = vector.shape_cast %73 : vector<1x4x8x16xf32> to vector<4x8x16xf32>
    %75 = vector.shape_cast %72 : vector<4x8x16xf32> to vector<1x4x8x16xf32>
    tpu.vector_store %arg9[%c0_23, %c0_24, %c0_25, %c0_26], %75 {strides = array<i32>} : memref<1x4x8x16xf32, #tpu.memory_space<vmem>>, vector<1x4x8x16xf32>,
    return
  }
  func.func @transform_0(%arg0: i32, %arg1: i32) -> (i32, i32, i32) {
    %c0_i32 = arith.constant 0 : i32
    %c0_i32_0 = arith.constant 0 : i32
    return %arg0, %arg1, %c0_i32 : i32, i32, i32
  }
  func.func @transform_1(%arg0: i32, %arg1: i32) -> (i32, i32) {
    %c0_i32 = arith.constant 0 : i32
    %c0_i32_0 = arith.constant 0 : i32
    %c0_i32_1 = arith.constant 0 : i32
    return %c0_i32, %c0_i32_0 : i32, i32
  }
  func.func @transform_2(%arg0: i32, %arg1: i32) -> (i32, i32) {
    %c0_i32 = arith.constant 0 : i32
    %c0_i32_0 = arith.constant 0 : i32
    %c0_i32_1 = arith.constant 0 : i32
    return %c0_i32, %c0_i32_0 : i32, i32
  }
  func.func @transform_3(%arg0: i32, %arg1: i32) -> (i32, i32) {
    %c0_i32 = arith.constant 0 : i32
    %c0_i32_0 = arith.constant 0 : i32
    %c0_i32_1 = arith.constant 0 : i32
    return %c0_i32, %c0_i32_0 : i32, i32
  }
  func.func @transform_4(%arg0: i32, %arg1: i32) -> (i32, i32) {
    %c0_i32 = arith.constant 0 : i32
    %c0_i32_0 = arith.constant 0 : i32
    %c0_i32_1 = arith.constant 0 : i32
    return %c0_i32, %c0_i32_0 : i32, i32
  }
  func.func @transform_5(%arg0: i32, %arg1: i32) -> (i32, i32, i32, i32) {
    %c0_i32 = arith.constant 0 : i32
    %c0_i32_0 = arith.constant 0 : i32
    %c0_i32_1 = arith.constant 0 : i32
    return %arg0, %c0_i32, %arg1, %c0_i32_0 : i32, i32, i32, i32
  }
  func.func @transform_6(%arg0: i32, %arg1: i32) -> (i32, i32, i32, i32) {
    %c0_i32 = arith.constant 0 : i32
    %c0_i32_0 = arith.constant 0 : i32
    %c0_i32_1 = arith.constant 0 : i32
    return %arg0, %c0_i32, %arg1, %c0_i32_0 : i32, i32, i32, i32
  }
  func.func @transform_7(%arg0: i32, %arg1: i32) -> (i32, i32, i32, i32) {
    %c0_i32 = arith.constant 0 : i32
    %c0_i32_0 = arith.constant 0 : i32
    %c0_i32_1 = arith.constant 0 : i32
    return %arg0, %c0_i32, %arg1, %c0_i32_0 : i32, i32, i32, i32
  }
}

</mosaic_0001>

<llo_original>
// kernel: tpu_custom_call.1
$region0: #{tpu_custom_call.1}
  #allocation0 [shape = 'u32[]', space=smem, size = 0x4, offset = 0x4, fixed_abs, tag = 'smem constant byte address 0x4 - core index']
  #allocation1 [shape = 'u32[144,128]{1,0:T(1,128)}', space=vmem, size = 0x12000, scoped, tag = 'internal scratch']
  %s0 = inlined_call_operand.hbm [shape: f32[2,16,64], index: 0, kind: input, shape index: {}]
  %s1 = inlined_call_operand.vmem [shape: f32[1,64], index: 1, kind: input, shape index: {}]
  %s2 = inlined_call_operand.hbm [shape: f32[1,64], index: 2, kind: input, shape index: {}]
  %s3 = inlined_call_operand.hbm [shape: f32[64,192], index: 3, kind: input, shape index: {}]
  %s4 = inlined_call_operand.vmem [shape: f32[1,192], index: 4, kind: input, shape index: {}]
  %s5 = inlined_call_operand.hbm [shape: f32[2,4,16,16], index: 5, kind: output, shape index: {0}]
  %s6 = inlined_call_operand.hbm [shape: f32[2,4,16,16], index: 6, kind: output, shape index: {1}]
  %s7 = inlined_call_operand.hbm [shape: f32[2,4,16,16], index: 7, kind: output, shape index: {2}]
  %8 = xla_tuple %s5, %s6, %s7
  %s9 = sld [smem:[#allocation0]]
  $region81: #{tpu_custom_call.1} parent=0
    _
  %s11 = ssub.s32 1, %s9
  %s12 = scalar_select 0, %s11, %s9
  $region1: #{tpu_custom_call.1} parent=0
    #allocation2 [shape = 'u8[8192]{0}', space=vmem, size = 0x2000, scoped, tag = 'input window, operand 0']
    #allocation3 [shape = 's32[2]{0}', space=sflag, size = 0x8, scoped, tag = 'scoped memory for tpu_custom_call.1']
    #allocation4 [shape = 's32[2]{0}', space=sflag, size = 0x8, scoped, tag = 'scoped memory for tpu_custom_call.1']
    #allocation5 [shape = 'u8[512]{0}', space=vmem, size = 0x400, scoped, tag = 'input window, operand 2, single buffered']
    #allocation6 [shape = 's32[1]{0}', space=sflag, size = 0x4, scoped, tag = 'scoped memory for tpu_custom_call.1']
    #allocation7 [shape = 'u8[65536]{0}', space=vmem, size = 0x10000, scoped, tag = 'input window, operand 3, single buffered']
    #allocation8 [shape = 'u8[32768]{0}', space=vmem, size = 0x8000, scoped, tag = 'output window, operand 0']
    #allocation9 [shape = 'u8[32768]{0}', space=vmem, size = 0x8000, scoped, tag = 'output window, operand 1']
    #allocation10 [shape = 's32[2]{0}', space=sflag, size = 0x8, scoped, tag = 'scoped memory for tpu_custom_call.1']
    #allocation11 [shape = 'u8[32768]{0}', space=vmem, size = 0x8000, scoped, tag = 'output window, operand 2']
    %13 = vsyncpa [#allocation3], 0
    %s14 = scalar_lea.sflag [#allocation3], 1
    %15 = vsyncpa %s14, 0
    %16 = vsyncpa [#allocation6], 0
    %17 = vsyncpa [#allocation4], 0
    %s18 = scalar_lea.sflag [#allocation4], 1
    %19 = vsyncpa %s18, 0
    %20 = vsyncpa [#allocation10], 0
    %s21 = scalar_lea.sflag [#allocation10], 1
    %22 = vsyncpa %s21, 0
    loop: start=0, step=1, limit=6
    $region2: #{tpu_custom_call.1} parent=1 // loop_pre_header
      _
    $region3: #{tpu_custom_call.1} parent=1 // loop_header
      %s24 = sphi 0, %s28
      %p25 = scmp.ge.s32.totalorder %s24, 6
      %s31 = sphi 0, %s43
      %s32 = sphi 0, %s39
      %s33 = sphi 0, %s31
      %s34 = sphi 0, %s32
      %s35 = sphi 0, %s33
      %s36 = sphi 0, %s34
      %s48 = sphi 0, %s50
      %s51 = sphi 0, %s48
      %s52 = sphi 0, %s51
      %s68 = sphi 0, %s52
      %s72 = sphi 0, %s72
      %s74 = sphi 0, %s72
      %s75 = sphi 0, %s74
      %s89 = sphi 0, %s75
      %s93 = sphi 0, %s93
      %s95 = sphi 0, %s93
      %s96 = sphi 0, %s95
      %s110 = sphi 0, %s96
      %s114 = sphi 0, %s114
      %s116 = sphi 0, %s114
      %s117 = sphi 0, %s116
      %s131 = sphi 0, %s117
      %s135 = sphi 0, %s135
      %s137 = sphi 0, %s135
      %s138 = sphi 0, %s137
      %s152 = sphi 0, %s138
      %s160 = sphi 0, %s162
      %s163 = sphi 0, %s160
      %s164 = sphi 0, %s163
      %s180 = sphi 0, %s164
      %s188 = sphi 0, %s190
      %s191 = sphi 0, %s188
      %s192 = sphi 0, %s191
      %s208 = sphi 0, %s192
      %s216 = sphi 0, %s218
      %s219 = sphi 0, %s216
      %s220 = sphi 0, %s219
      %s236 = sphi 0, %s220
    $region4: #{tpu_custom_call.1} parent=1 // loop_header_branch
      %27 = sbr.rel (%p25) target = $region8
    $region5: #{tpu_custom_call.1} parent=1 // loop_body
      %s29 = ssub.s32 %s24, 1
      %s30 = ssub.s32 %s24, 2
      %s37 = sadd.s32 1, %s32
      %p38 = scmp.ge.s32.totalorder %s37, 2
      %s39 = scalar_select %p38, 0, %s37
      %s40 = sadd.s32 1, %s31
      %s41 = scalar_select %p38, %s40, %s31
      %p42 = scmp.ge.s32.totalorder %s41, 2
      %s43 = scalar_select %p42, 0, %s41
      %s44 = ssub.s32 %s31, %s43
      %s45 = ssub.s32 %s32, %s39
      %s46 = sor.u32 %s44, %s45
      %p47 = scmp.eq.s32.totalorder %s46, 0
      %s49 = sadd.s32 %s48, 1
      %s50 = scalar_select %p47, %s48, %s49
      %p53 = pneg %p47
      %p54 = scmp.eq.s32.totalorder %s24, 3
      %p55 = por %p53, %p54
      %p56 = scmp.ne.s32.totalorder %s48, %s51
      %p57 = scmp.eq.s32.totalorder %s24, 0
      %p58 = por %p56, %p57
      %p59 = scmp.ne.s32.totalorder %s48, %s51
      %p60 = scmp.eq.s32.totalorder %s29, 3
      %p61 = por %p59, %p60
      %p62 = scmp.ne.s32.totalorder %s51, %s52
      %p63 = scmp.eq.s32.totalorder %s29, 0
      %p64 = por %p62, %p63
      %p65 = scmp.ne.s32.totalorder %s51, %s52
      %p66 = scmp.eq.s32.totalorder %s30, 3
      %p67 = por %p65, %p66
      %p69 = scmp.ne.s32.totalorder %s52, %s68
      %p70 = scmp.eq.s32.totalorder %s30, 0
      %p71 = por %p69, %p70
      %s73 = sadd.s32 %s72, 1
      %p76 = scmp.eq.s32.totalorder %s24, 3
      %p77 = scmp.ne.s32.totalorder %s72, %s74
      %p78 = scmp.eq.s32.totalorder %s24, 0
      %p79 = por %p77, %p78
      %p80 = scmp.ne.s32.totalorder %s72, %s74
      %p81 = scmp.eq.s32.totalorder %s29, 3
      %p82 = por %p80, %p81
      %p83 = scmp.ne.s32.totalorder %s74, %s75
      %p84 = scmp.eq.s32.totalorder %s29, 0
      %p85 = por %p83, %p84
      %p86 = scmp.ne.s32.totalorder %s74, %s75
      %p87 = scmp.eq.s32.totalorder %s30, 3
      %p88 = por %p86, %p87
      %p90 = scmp.ne.s32.totalorder %s75, %s89
      %p91 = scmp.eq.s32.totalorder %s30, 0
      %p92 = por %p90, %p91
      %s94 = sadd.s32 %s93, 1
      %p97 = scmp.eq.s32.totalorder %s24, 3
      %p98 = scmp.ne.s32.totalorder %s93, %s95
      %p99 = scmp.eq.s32.totalorder %s24, 0
      %p100 = por %p98, %p99
      %p101 = scmp.ne.s32.totalorder %s93, %s95
      %p102 = scmp.eq.s32.totalorder %s29, 3
      %p103 = por %p101, %p102
      %p104 = scmp.ne.s32.totalorder %s95, %s96
      %p105 = scmp.eq.s32.totalorder %s29, 0
      %p106 = por %p104, %p105
      %p107 = scmp.ne.s32.totalorder %s95, %s96
      %p108 = scmp.eq.s32.totalorder %s30, 3
      %p109 = por %p107, %p108
      %p111 = scmp.ne.s32.totalorder %s96, %s110
      %p112 = scmp.eq.s32.totalorder %s30, 0
      %p113 = por %p111, %p112
      %s115 = sadd.s32 %s114, 1
      %p118 = scmp.eq.s32.totalorder %s24, 3
      %p119 = scmp.ne.s32.totalorder %s114, %s116
      %p120 = scmp.eq.s32.totalorder %s24, 0
      %p121 = por %p119, %p120
      %p122 = scmp.ne.s32.totalorder %s114, %s116
      %p123 = scmp.eq.s32.totalorder %s29, 3
      %p124 = por %p122, %p123
      %p125 = scmp.ne.s32.totalorder %s116, %s117
      %p126 = scmp.eq.s32.totalorder %s29, 0
      %p127 = por %p125, %p126
      %p128 = scmp.ne.s32.totalorder %s116, %s117
      %p129 = scmp.eq.s32.totalorder %s30, 3
      %p130 = por %p128, %p129
      %p132 = scmp.ne.s32.totalorder %s117, %s131
      %p133 = scmp.eq.s32.totalorder %s30, 0
      %p134 = por %p132, %p133
      %s136 = sadd.s32 %s135, 1
      %p139 = scmp.eq.s32.totalorder %s24, 3
      %p140 = scmp.ne.s32.totalorder %s135, %s137
      %p141 = scmp.eq.s32.totalorder %s24, 0
      %p142 = por %p140, %p141
      %p143 = scmp.ne.s32.totalorder %s135, %s137
      %p144 = scmp.eq.s32.totalorder %s29, 3
      %p145 = por %p143, %p144
      %p146 = scmp.ne.s32.totalorder %s137, %s138
      %p147 = scmp.eq.s32.totalorder %s29, 0
      %p148 = por %p146, %p147
      %p149 = scmp.ne.s32.totalorder %s137, %s138
      %p150 = scmp.eq.s32.totalorder %s30, 3
      %p151 = por %p149, %p150
      %p153 = scmp.ne.s32.totalorder %s138, %s152
      %p154 = scmp.eq.s32.totalorder %s30, 0
      %p155 = por %p153, %p154
      %s156 = ssub.s32 %s31, %s43
      %s157 = ssub.s32 %s32, %s39
      %s158 = sor.u32 %s156, %s157
      %p159 = scmp.eq.s32.totalorder %s158, 0
      %s161 = sadd.s32 %s160, 1
      %s162 = scalar_select %p159, %s160, %s161
      %p165 = pneg %p159
      %p166 = scmp.eq.s32.totalorder %s24, 3
      %p167 = por %p165, %p166
      %p168 = scmp.ne.s32.totalorder %s160, %s163
      %p169 = scmp.eq.s32.totalorder %s24, 0
      %p170 = por %p168, %p169
      %p171 = scmp.ne.s32.totalorder %s160, %s163
      %p172 = scmp.eq.s32.totalorder %s29, 3
      %p173 = por %p171, %p172
      %p174 = scmp.ne.s32.totalorder %s163, %s164
      %p175 = scmp.eq.s32.totalorder %s29, 0
      %p176 = por %p174, %p175
      %p177 = scmp.ne.s32.totalorder %s163, %s164
      %p178 = scmp.eq.s32.totalorder %s30, 3
      %p179 = por %p177, %p178
      %p181 = scmp.ne.s32.totalorder %s164, %s180
      %p182 = scmp.eq.s32.totalorder %s30, 0
      %p183 = por %p181, %p182
      %s184 = ssub.s32 %s31, %s43
      %s185 = ssub.s32 %s32, %s39
      %s186 = sor.u32 %s184, %s185
      %p187 = scmp.eq.s32.totalorder %s186, 0
      %s189 = sadd.s32 %s188, 1
      %s190 = scalar_select %p187, %s188, %s189
      %p193 = pneg %p187
      %p194 = scmp.eq.s32.totalorder %s24, 3
      %p195 = por %p193, %p194
      %p196 = scmp.ne.s32.totalorder %s188, %s191
      %p197 = scmp.eq.s32.totalorder %s24, 0
      %p198 = por %p196, %p197
      %p199 = scmp.ne.s32.totalorder %s188, %s191
      %p200 = scmp.eq.s32.totalorder %s29, 3
      %p201 = por %p199, %p200
      %p202 = scmp.ne.s32.totalorder %s191, %s192
      %p203 = scmp.eq.s32.totalorder %s29, 0
      %p204 = por %p202, %p203
      %p205 = scmp.ne.s32.totalorder %s191, %s192
      %p206 = scmp.eq.s32.totalorder %s30, 3
      %p207 = por %p205, %p206
      %p209 = scmp.ne.s32.totalorder %s192, %s208
      %p210 = scmp.eq.s32.totalorder %s30, 0
      %p211 = por %p209, %p210
      %s212 = ssub.s32 %s31, %s43
      %s213 = ssub.s32 %s32, %s39
      %s214 = sor.u32 %s212, %s213
      %p215 = scmp.eq.s32.totalorder %s214, 0
      %s217 = sadd.s32 %s216, 1
      %s218 = scalar_select %p215, %s216, %s217
      %p221 = pneg %p215
      %p222 = scmp.eq.s32.totalorder %s24, 3
      %p223 = por %p221, %p222
      %p224 = scmp.ne.s32.totalorder %s216, %s219
      %p225 = scmp.eq.s32.totalorder %s24, 0
      %p226 = por %p224, %p225
      %p227 = scmp.ne.s32.totalorder %s216, %s219
      %p228 = scmp.eq.s32.totalorder %s29, 3
      %p229 = por %p227, %p228
      %p230 = scmp.ne.s32.totalorder %s219, %s220
      %p231 = scmp.eq.s32.totalorder %s29, 0
      %p232 = por %p230, %p231
      %p233 = scmp.ne.s32.totalorder %s219, %s220
      %p234 = scmp.eq.s32.totalorder %s30, 3
      %p235 = por %p233, %p234
      %p237 = scmp.ne.s32.totalorder %s220, %s236
      %p238 = scmp.eq.s32.totalorder %s30, 0
      %p239 = por %p237, %p238
      %p240 = scmp.le.s32.totalorder 1, %s24
      %p241 = scmp.lt.s32.totalorder %s24, 5
      %p242 = pnand %p240, %p241
      %p243 = pneg %p242
      // Predicated region
      $region9: #{tpu_custom_call.1} parent=5 // pred_check
        _
      $region10: #{tpu_custom_call.1} parent=5 // pred_check_branch
        %245 = sbr.rel (%p242) target = $region12
      $region11: #{tpu_custom_call.1} parent=5 // pred_region
        %s246 = ssub.s32 %s24, 1
        // Predicated region
        $region13: #{tpu_custom_call.1} parent=11 // pred_check
          %p247 = pneg %p85
        $region14: #{tpu_custom_call.1} parent=11 // pred_check_branch
          %249 = sbr.rel (%p247) target = $region16
        $region15: #{tpu_custom_call.1} parent=11 // pred_region
          _
        $region16: #{tpu_custom_call.1} parent=11 // pred_fallthru
          _
        // Predicated region
        $region17: #{tpu_custom_call.1} parent=11 // pred_check
          %p250 = pneg %p106
        $region18: #{tpu_custom_call.1} parent=11 // pred_check_branch
          %252 = sbr.rel (%p250) target = $region20
        $region19: #{tpu_custom_call.1} parent=11 // pred_region
          %s254 = ssub.s32 16, 16
          %255 = vsyncadd [#allocation6], %s254
          %s257 = sshll.u32 [#allocation5], 4
          %s258 = int_to_ptr.vmem [resolvable:$true] %s257
          %260 = dma.hbm_to_vmem [thread:$0]  %s2, 16, %s258, [#allocation6]
        $region20: #{tpu_custom_call.1} parent=11 // pred_fallthru
          _
        // Predicated region
        $region21: #{tpu_custom_call.1} parent=11 // pred_check
          %p261 = pneg %p127
        $region22: #{tpu_custom_call.1} parent=11 // pred_check_branch
          %263 = sbr.rel (%p261) target = $region24
        $region23: #{tpu_custom_call.1} parent=11 // pred_region
          %s265 = ssub.s32 2048, 2048
          %266 = vsyncadd [#allocation6], %s265
          %s267 = sshll.u32 [#allocation7], 4
          %s268 = int_to_ptr.vmem [resolvable:$true] %s267
          %273 = dma.hbm_to_vmem [thread:$0]  %s3, 2048, %s268, [#allocation6], 256, 256, 16
        $region24: #{tpu_custom_call.1} parent=11 // pred_fallthru
          _
        // Predicated region
        $region25: #{tpu_custom_call.1} parent=11 // pred_check
          %p274 = pneg %p148
        $region26: #{tpu_custom_call.1} parent=11 // pred_check_branch
          %276 = sbr.rel (%p274) target = $region28
        $region27: #{tpu_custom_call.1} parent=11 // pred_region
          _
        $region28: #{tpu_custom_call.1} parent=11 // pred_fallthru
          _
      $region12: #{tpu_custom_call.1} parent=5 // pred_fallthru
        _
      %p277 = scmp.lt.s32.totalorder %s24, 4
      // Predicated region
      $region29: #{tpu_custom_call.1} parent=5 // pred_check
        %p278 = pneg %p277
      $region30: #{tpu_custom_call.1} parent=5 // pred_check_branch
        %280 = sbr.rel (%p278) target = $region32
      $region31: #{tpu_custom_call.1} parent=5 // pred_region
        // Predicated region
        $region33: #{tpu_custom_call.1} parent=31 // pred_check
          %p281 = pneg %p58
        $region34: #{tpu_custom_call.1} parent=31 // pred_check_branch
          %283 = sbr.rel (%p281) target = $region36
        $region35: #{tpu_custom_call.1} parent=31 // pred_region
          %s284 = sand.u32 %s48, 1
          %s285 = scalar_lea.sflag [#allocation3], %s284
          %s286 = sand.u32 %s48, 1
          %s287 = smul.addr %s286, 8
          %s288 = scalar_lea.vmem [#allocation2], %s287
          %s290 = ssub.s32 128, 128
          %291 = vsyncadd %s285, %s290
          %s292 = smul.addr %s31, 2
          %s293 = sadd.s32 %s32, %s292
          %s294 = smul.addr %s293, 128
          %s295 = scalar_lea.hbm %s0, %s294
          %s297 = sshll.u32 %s288, 4
          %s298 = int_to_ptr.vmem [resolvable:$true] %s297
          %300 = dma.hbm_to_vmem [thread:$0]  %s295, 128, %s298, %s285
        $region36: #{tpu_custom_call.1} parent=31 // pred_fallthru
          _
      $region32: #{tpu_custom_call.1} parent=5 // pred_fallthru
        _
      %p301 = scmp.le.s32.totalorder 1, %s24
      %p302 = scmp.lt.s32.totalorder %s24, 5
      %p303 = pnand %p301, %p302
      %p304 = pneg %p303
      // Predicated region
      $region37: #{tpu_custom_call.1} parent=5 // pred_check
        _
      $region38: #{tpu_custom_call.1} parent=5 // pred_check_branch
        %306 = sbr.rel (%p303) target = $region40
      $region39: #{tpu_custom_call.1} parent=5 // pred_region
        %s307 = ssub.s32 %s24, 1
        %s308 = sand.u32 %s51, 1
        %s309 = scalar_lea.sflag [#allocation3], %s308
        %s310 = sand.u32 %s51, 1
        %s311 = smul.addr %s310, 8
        %s312 = scalar_lea.vmem [#allocation2], %s311
        // Predicated region
        $region41: #{tpu_custom_call.1} parent=39 // pred_check
          %p313 = pneg %p64
        $region42: #{tpu_custom_call.1} parent=39 // pred_check_branch
          %315 = sbr.rel (%p313) target = $region44
        $region43: #{tpu_custom_call.1} parent=39 // pred_region
          %316 = dma.done %s309, 128
        $region44: #{tpu_custom_call.1} parent=39 // pred_fallthru
          _
        // Predicated region
        $region45: #{tpu_custom_call.1} parent=39 // pred_check
          %p317 = pneg %p106
        $region46: #{tpu_custom_call.1} parent=39 // pred_check_branch
          %319 = sbr.rel (%p317) target = $region48
        $region47: #{tpu_custom_call.1} parent=39 // pred_region
          %320 = dma.done [#allocation6], 16
        $region48: #{tpu_custom_call.1} parent=39 // pred_fallthru
          _
        // Predicated region
        $region49: #{tpu_custom_call.1} parent=39 // pred_check
          %p321 = pneg %p127
        $region50: #{tpu_custom_call.1} parent=39 // pred_check_branch
          %323 = sbr.rel (%p321) target = $region52
        $region51: #{tpu_custom_call.1} parent=39 // pred_region
          %324 = dma.done [#allocation6], 2048
        $region52: #{tpu_custom_call.1} parent=39 // pred_fallthru
          _
        %s325 = sand.u32 %s51, 1
        %s326 = scalar_lea.sflag [#allocation3], %s325
        %s327 = sand.u32 %s51, 1
        %s328 = smul.addr %s327, 8
        %s329 = scalar_lea.vmem [#allocation2], %s328
        %p330 = pneg %p64
        %p331 = pneg %p61
        %p332 = pneg %p85
        %p333 = pneg %p82
        %p334 = pneg %p106
        %p335 = pneg %p103
        %p336 = pneg %p127
        %p337 = pneg %p124
        %p338 = pneg %p148
        %p339 = pneg %p145
        %p340 = pneg %p176
        %p341 = pneg %p173
        %s342 = sand.u32 %s163, 1
        %s343 = scalar_lea.sflag [#allocation4], %s342
        %s344 = sand.u32 %s163, 1
        %s345 = smul.addr %s344, 32
        %s346 = scalar_lea.vmem [#allocation8], %s345
        %p347 = pneg %p204
        %p348 = pneg %p201
        %s349 = sand.u32 %s29, 1
        %s350 = scalar_lea.sflag [#allocation10], %s349
        %s351 = sand.u32 %s191, 1
        %s352 = smul.addr %s351, 32
        %s353 = scalar_lea.vmem [#allocation9], %s352
        %p354 = pneg %p232
        %p355 = pneg %p229
        %s356 = sand.u32 %s29, 1
        %s357 = scalar_lea.sflag [#allocation10], %s356
        %s358 = sand.u32 %s219, 1
        %s359 = smul.addr %s358, 32
        %s360 = scalar_lea.vmem [#allocation11], %s359
        %v361 = vld [vmem:[%s312] sm:$0xff]
        %v362 = vld [vmem:[%s1] sm:$0x1]
        %v363 = vld [vmem:[#allocation5] sm:$0x1]
        %vm364 = vcmask 523264
        %v365 = vsel %vm364, %v361, 0.0
        %366 = vadd.xlane.f32.xlu0 %v365
        %v367 = vpop.xlane.xlu0 %366
        %v368 = vrcp.pop 64.0
        %v369 = vmul.f32 %v367, %v368
        %v370 = vsub.f32 %v361, %v369
        %v371 = vmul.f32 %v370, %v370
        %v372 = vsel %vm364, %v371, 0.0
        %373 = vadd.xlane.f32.xlu0 %v372
        %v374 = vpop.xlane.xlu0 %373
        %v375 = vmul.f32 %v374, %v368
        %v376 = vadd.f32 %v375, 1e-05
        %v377 = vrsqrt.pop %v376
        %v378 = vmul.f32 %v370, %v377
        %v380 = vlaneseq
        %v381 = vshrl.u32 %v380, 7
        %v382 = vsub.s32 0, %v381
        %v383 = vrot.slane %v362, %v382
        %v385 = vmul.f32 %v378, %v383
        %v387 = vlaneseq
        %v388 = vshrl.u32 %v387, 7
        %v389 = vsub.s32 0, %v388
        %v390 = vrot.slane %v363, %v389
        %v392 = vadd.f32 %v385, %v390
        %v393 = vld [vmem:[#allocation7] sm:$0xff]
        %v394 = vld [vmem:[#allocation7 + $0x8] sm:$0xff]
        %v395 = vld [vmem:[#allocation7 + $0x10] sm:$0xff]
        %v396 = vld [vmem:[#allocation7 + $0x18] sm:$0xff]
        %v397 = vld [vmem:[#allocation7 + $0x20] sm:$0xff]
        %v398 = vld [vmem:[#allocation7 + $0x28] sm:$0xff]
        %v399 = vld [vmem:[#allocation7 + $0x30] sm:$0xff]
        %v400 = vld [vmem:[#allocation7 + $0x38] sm:$0xff]
        %v401 = vld [vmem:[#allocation7 + $0x40] sm:$0xff]
        %v402 = vld [vmem:[#allocation7 + $0x48] sm:$0xff]
        %v403 = vld [vmem:[#allocation7 + $0x50] sm:$0xff]
        %v404 = vld [vmem:[#allocation7 + $0x58] sm:$0xff]
        %v405 = vld [vmem:[#allocation7 + $0x60] sm:$0xff]
        %v406 = vld [vmem:[#allocation7 + $0x68] sm:$0xff]
        %v407 = vld [vmem:[#allocation7 + $0x70] sm:$0xff]
        %v408 = vld [vmem:[#allocation7 + $0x78] sm:$0xff]
        %v409 = vld [vmem:[%s4] sm:$0x3]
        %v411 = vlaneseq
        %v412 = vshrl.u32 %v411, 7
        %v413 = vsub.s32 0, %v412
        %v414 = vrot.slane %v409, %v413
        %v415 = vlaneseq
        %v416 = vshrl.u32 %v415, 7
        %v417 = vsub.s32 1, %v416
        %v418 = vrot.slane %v409, %v417
        %v422 = vsel %vm364, %v392, 0
        %424 = vmatprep.subr.mxu0 0.0
        %425 = vmatpush1.msra.mxu0 0.0
        %426 = vmatprep.subr.mxu0 0.0
        %427 = vmatpush1.msra.mxu0 0.0
        %428 = vmatprep.subr.mxu0 0.0
        %429 = vmatpush1.msra.mxu0 0.0
        %430 = vmatprep.subr.mxu0 0.0
        %431 = vmatpush1.msra.mxu0 0.0
        %432 = vmatprep.subr.mxu0 0.0
        %433 = vmatpush1.msra.mxu0 0.0
        %434 = vmatprep.subr.mxu0 0.0
        %435 = vmatpush1.msra.mxu0 0.0
        %436 = vmatprep.subr.mxu0 0.0
        %437 = vmatpush1.msra.mxu0 0.0
        %438 = vmatprep.subr.mxu0 0.0
        %439 = vmatpush1.msra.mxu0 0.0
        %440 = vmatprep.subr.mxu0 %v408
        %441 = vmatpush1.msra.mxu0 %v407
        %442 = vmatprep.subr.mxu0 %v406
        %443 = vmatpush1.msra.mxu0 %v405
        %444 = vmatprep.subr.mxu0 %v404
        %445 = vmatpush1.msra.mxu0 %v403
        %446 = vmatprep.subr.mxu0 %v402
        %447 = vmatpush1.msra.mxu0 %v401
        %448 = vmatprep.subr.mxu0 %v400
        %449 = vmatpush1.msra.mxu0 %v399
        %450 = vmatprep.subr.mxu0 %v398
        %451 = vmatpush1.msra.mxu0 %v397
        %452 = vmatprep.subr.mxu0 %v396
        %453 = vmatpush1.msra.mxu0 %v395
        %454 = vmatprep.subr.mxu0 %v394
        %455 = vmatpush1.msra.mxu0 %v393
        %456 = vmatprep.subr.mxu0 0.0
        %457 = vmatpush2.msra.mxu0 0.0
        %458 = vmatprep.subr.mxu0 0.0
        %459 = vmatpush2.msra.mxu0 0.0
        %460 = vmatprep.subr.mxu0 0.0
        %461 = vmatpush2.msra.mxu0 0.0
        %462 = vmatprep.subr.mxu0 0.0
        %463 = vmatpush2.msra.mxu0 0.0
        %464 = vmatprep.subr.mxu0 0.0
        %465 = vmatpush2.msra.mxu0 0.0
        %466 = vmatprep.subr.mxu0 0.0
        %467 = vmatpush2.msra.mxu0 0.0
        %468 = vmatprep.subr.mxu0 0.0
        %469 = vmatpush2.msra.mxu0 0.0
        %470 = vmatprep.subr.mxu0 0.0
        %471 = vmatpush2.msra.mxu0 0.0
        %472 = vmatprep.subr.mxu0 0.0
        %473 = vmatpush2.msra.mxu0 0.0
        %474 = vmatprep.subr.mxu0 0.0
        %475 = vmatpush2.msra.mxu0 0.0
        %476 = vmatprep.subr.mxu0 0.0
        %477 = vmatpush2.msra.mxu0 0.0
        %478 = vmatprep.subr.mxu0 0.0
        %479 = vmatpush2.msra.mxu0 0.0
        %480 = vmatprep.subr.mxu0 0.0
        %481 = vmatpush2.msra.mxu0 0.0
        %482 = vmatprep.subr.mxu0 0.0
        %483 = vmatpush2.msra.mxu0 0.0
        %484 = vmatprep.subr.mxu0 0.0
        %485 = vmatpush2.msra.mxu0 0.0
        %486 = vmatprep.subr.mxu0 0.0
        %487 = vmatpush2.msra.mxu0 0.0
        %488 = vmatprep.mubr.f32.mxu0 0.0
        %489 = vmatmul.mubr.f32.gmra.mxu0 %v422
        %v490 = vpop.f32.mrf.mxu0
        %v491 = vadd.f32 %v414, %v490
        %v492 = vpop.f32.mrf.mxu0
        %v493 = vadd.f32 %v418, %v492
        %494 = vdwg.mxu0
        %496 = vrot.lane.b32.xlu0 %v491, 112
        %v497 = vpop.permute.xlu0 %496
        %499 = vrot.lane.b32.xlu0 %v491, 96
        %v500 = vpop.permute.xlu0 %499
        %502 = vrot.lane.b32.xlu0 %v491, 80
        %v503 = vpop.permute.xlu0 %502
        %vm505 = vcmask 130048
        %506 = vst.msk [vmem:[%s346] sm:$0xff] %vm505, %v491
        %507 = vst.msk [vmem:[%s346 + $0x8] sm:$0xff] %vm505, %v497
        %508 = vst.msk [vmem:[%s346 + $0x10] sm:$0xff] %vm505, %v500
        %509 = vst.msk [vmem:[%s346 + $0x18] sm:$0xff] %vm505, %v503
        %510 = vrot.lane.b32.xlu0 %v491, 64
        %v511 = vpop.permute.xlu0 %510
        %512 = vrot.lane.b32.xlu0 %v497, 64
        %v513 = vpop.permute.xlu0 %512
        %514 = vrot.lane.b32.xlu0 %v500, 64
        %v515 = vpop.permute.xlu0 %514
        %516 = vrot.lane.b32.xlu0 %v503, 64
        %v517 = vpop.permute.xlu0 %516
        %522 = vst.msk [vmem:[%s353] sm:$0xff] %vm505, %v511
        %523 = vst.msk [vmem:[%s353 + $0x8] sm:$0xff] %vm505, %v513
        %524 = vst.msk [vmem:[%s353 + $0x10] sm:$0xff] %vm505, %v515
        %525 = vst.msk [vmem:[%s353 + $0x18] sm:$0xff] %vm505, %v517
        %527 = vrot.lane.b32.xlu0 %v493, 112
        %v528 = vpop.permute.xlu0 %527
        %530 = vrot.lane.b32.xlu0 %v493, 96
        %v531 = vpop.permute.xlu0 %530
        %533 = vrot.lane.b32.xlu0 %v493, 80
        %v534 = vpop.permute.xlu0 %533
        %536 = vst.msk [vmem:[%s360] sm:$0xff] %vm505, %v493
        %537 = vst.msk [vmem:[%s360 + $0x8] sm:$0xff] %vm505, %v528
        %538 = vst.msk [vmem:[%s360 + $0x10] sm:$0xff] %vm505, %v531
        %539 = vst.msk [vmem:[%s360 + $0x18] sm:$0xff] %vm505, %v534
        %s540 = sand.u32 %s163, 1
        %s541 = scalar_lea.sflag [#allocation4], %s540
        %s542 = sand.u32 %s163, 1
        %s543 = smul.addr %s542, 32
        %s544 = scalar_lea.vmem [#allocation8], %s543
        %s545 = sand.u32 %s29, 1
        %s546 = scalar_lea.sflag [#allocation10], %s545
        %s547 = sand.u32 %s191, 1
        %s548 = smul.addr %s547, 32
        %s549 = scalar_lea.vmem [#allocation9], %s548
        %s550 = sand.u32 %s29, 1
        %s551 = scalar_lea.sflag [#allocation10], %s550
        %s552 = sand.u32 %s219, 1
        %s553 = smul.addr %s552, 32
        %s554 = scalar_lea.vmem [#allocation11], %s553
        // Predicated region
        $region53: #{tpu_custom_call.1} parent=39 // pred_check
          %p555 = pneg %p173
        $region54: #{tpu_custom_call.1} parent=39 // pred_check_branch
          %557 = sbr.rel (%p555) target = $region56
        $region55: #{tpu_custom_call.1} parent=39 // pred_region
          %s559 = ssub.s32 512, 512
          %560 = vsyncadd %s541, %s559
          %s561 = smul.addr %s33, 8
          %s562 = sadd.s32 %s34, %s561
          %s563 = smul.addr %s562, 128
          %s564 = scalar_lea.hbm %s5, %s563
          %s565 = sshll.u32 %s544, 4
          %s566 = int_to_ptr.vmem [resolvable:$true] %s565
          %571 = dma.vmem_to_hbm [thread:$0]  %s566, 512, %s564, %s541, 128, 256, 8
        $region56: #{tpu_custom_call.1} parent=39 // pred_fallthru
          _
        // Predicated region
        $region57: #{tpu_custom_call.1} parent=39 // pred_check
          %p572 = pneg %p201
        $region58: #{tpu_custom_call.1} parent=39 // pred_check_branch
          %574 = sbr.rel (%p572) target = $region60
        $region59: #{tpu_custom_call.1} parent=39 // pred_region
          %s576 = ssub.s32 512, 512
          %577 = vsyncadd %s546, %s576
          %s578 = smul.addr %s33, 8
          %s579 = sadd.s32 %s34, %s578
          %s580 = smul.addr %s579, 128
          %s581 = scalar_lea.hbm %s6, %s580
          %s582 = sshll.u32 %s549, 4
          %s583 = int_to_ptr.vmem [resolvable:$true] %s582
          %588 = dma.vmem_to_hbm [thread:$0]  %s583, 512, %s581, %s546, 128, 256, 8
        $region60: #{tpu_custom_call.1} parent=39 // pred_fallthru
          _
        // Predicated region
        $region61: #{tpu_custom_call.1} parent=39 // pred_check
          %p589 = pneg %p229
        $region62: #{tpu_custom_call.1} parent=39 // pred_check_branch
          %591 = sbr.rel (%p589) target = $region64
        $region63: #{tpu_custom_call.1} parent=39 // pred_region
          %s593 = ssub.s32 512, 512
          %594 = vsyncadd %s551, %s593
          %s595 = smul.addr %s33, 8
          %s596 = sadd.s32 %s34, %s595
          %s597 = smul.addr %s596, 128
          %s598 = scalar_lea.hbm %s7, %s597
          %s599 = sshll.u32 %s554, 4
          %s600 = int_to_ptr.vmem [resolvable:$true] %s599
          %605 = dma.vmem_to_hbm [thread:$0]  %s600, 512, %s598, %s551, 128, 256, 8
        $region64: #{tpu_custom_call.1} parent=39 // pred_fallthru
          _
      $region40: #{tpu_custom_call.1} parent=5 // pred_fallthru
        _
      %p606 = scmp.le.s32.totalorder 2, %s24
      // Predicated region
      $region65: #{tpu_custom_call.1} parent=5 // pred_check
        %p607 = pneg %p606
      $region66: #{tpu_custom_call.1} parent=5 // pred_check_branch
        %609 = sbr.rel (%p607) target = $region68
      $region67: #{tpu_custom_call.1} parent=5 // pred_region
        %s610 = ssub.s32 %s24, 2
        // Predicated region
        $region69: #{tpu_custom_call.1} parent=67 // pred_check
          %p611 = pneg %p179
        $region70: #{tpu_custom_call.1} parent=67 // pred_check_branch
          %613 = sbr.rel (%p611) target = $region72
        $region71: #{tpu_custom_call.1} parent=67 // pred_region
          %s614 = sand.u32 %s164, 1
          %s615 = scalar_lea.sflag [#allocation4], %s614
          %s616 = sand.u32 %s164, 1
          %s617 = smul.addr %s616, 32
          %s618 = scalar_lea.vmem [#allocation8], %s617
          %619 = dma.done %s615, 512
        $region72: #{tpu_custom_call.1} parent=67 // pred_fallthru
          _
        // Predicated region
        $region73: #{tpu_custom_call.1} parent=67 // pred_check
          %p620 = pneg %p207
        $region74: #{tpu_custom_call.1} parent=67 // pred_check_branch
          %622 = sbr.rel (%p620) target = $region76
        $region75: #{tpu_custom_call.1} parent=67 // pred_region
          %s623 = sand.u32 %s30, 1
          %s624 = scalar_lea.sflag [#allocation10], %s623
          %s625 = sand.u32 %s192, 1
          %s626 = smul.addr %s625, 32
          %s627 = scalar_lea.vmem [#allocation9], %s626
          %628 = dma.done %s624, 512
        $region76: #{tpu_custom_call.1} parent=67 // pred_fallthru
          _
        // Predicated region
        $region77: #{tpu_custom_call.1} parent=67 // pred_check
          %p629 = pneg %p235
        $region78: #{tpu_custom_call.1} parent=67 // pred_check_branch
          %631 = sbr.rel (%p629) target = $region80
        $region79: #{tpu_custom_call.1} parent=67 // pred_region
          %s632 = sand.u32 %s30, 1
          %s633 = scalar_lea.sflag [#allocation10], %s632
          %s634 = sand.u32 %s220, 1
          %s635 = smul.addr %s634, 32
          %s636 = scalar_lea.vmem [#allocation11], %s635
          %637 = dma.done %s633, 512
        $region80: #{tpu_custom_call.1} parent=67 // pred_fallthru
          _
      $region68: #{tpu_custom_call.1} parent=5 // pred_fallthru
        _
    $region6: #{tpu_custom_call.1} parent=1 // loop_footer
      %s28 = sadd.s32 1, %s24
    $region7: #{tpu_custom_call.1} parent=1 // loop_footer_branch
      %23 = sbr.rel target = $region3
    $region8: #{tpu_custom_call.1} parent=1 // loop_exit
      _
    %638 = vsyncpa [#allocation3], 1
    %s639 = scalar_lea.sflag [#allocation3], 1
    %640 = vsyncpa %s639, 1
    %641 = vsyncpa [#allocation6], 1
    %642 = vsyncpa [#allocation4], 1
    %s643 = scalar_lea.sflag [#allocation4], 1
    %644 = vsyncpa %s643, 1
    %645 = vsyncpa [#allocation10], 1
    %s646 = scalar_lea.sflag [#allocation10], 1
    %647 = vsyncpa %s646, 1

</llo_original>
